<compile_context>
chip_gen: v6e
topology: v6e:2x2x1
jax: 0.10.0
libtpu: 0.0.40
codegen_flags: <defaults>
</compile_context>

<pallas_src>
import functools

import jax
import jax.numpy as jnp
from jax.experimental import pallas as pl
from jax.experimental.pallas import tpu as pltpu


def _vmem_capacity_bytes():
    """Physical VMEM of the attached TPU (falls back to the smallest, v7x)."""
    try:
        return int(pltpu.get_tpu_info().vmem_capacity_bytes)
    except Exception:  # unknown backend / API drift -> conservative default
        return 64 << 20


def _smoothness_kernel(x_ref, wd_ref, wh_ref, ww_ref, out_ref, *,
                       shift_d, shift_h, block_rows, total_rows, mask_rows,
                       lane_groups):
    """One grid step: weighted TV partial sum of a (block_rows, Lp) row block."""
    x = x_ref[...]                          # (B, Lp), input dtype (roll stays narrow)
    xf = x.astype(jnp.float32)

    def dir_contrib(shift, w_ref_):
        # neighbor[l] = x[l - shift]; the resident weight row is zero wherever
        # the pair would cross a W-row / H-plane / slab boundary or fall in the
        # padded lane tail, and it already carries the 1/count normalisation.
        nbr = pltpu.roll(x, shift=shift, axis=1).astype(jnp.float32)
        return w_ref_[...] * jnp.abs(xf - nbr)

    contrib = dir_contrib(shift_d, wd_ref)             # D direction
    contrib = contrib + dir_contrib(shift_h, wh_ref)   # H direction
    contrib = contrib + dir_contrib(1, ww_ref)         # W direction

    if mask_rows:
        # Last block overruns the N*C axis: kill garbage rows with a NaN-safe
        # select (never multiply-by-mask -- garbage may be inf/NaN).
        row = (jax.lax.broadcasted_iota(jnp.int32, (block_rows, 1), 0)
               + pl.program_id(0) * block_rows)
        contrib = jnp.where(row < total_rows, contrib, 0.0)

    # Bulk reduction with pure VPU adds over aligned 128-lane groups; only the
    # final single vreg-column (B, 128) goes through the XLU.
    if lane_groups <= 512:
        partial = contrib[:, 0:128]
        for g in range(1, lane_groups):
            partial = partial + contrib[:, g * 128:(g + 1) * 128]
        out_ref[0, 0] = jnp.sum(partial)
    else:
        # TODO(synk): for very long rows fold lane groups with a fori_loop to
        # bound trace size instead of a full-block reduction.
        out_ref[0, 0] = jnp.sum(contrib)


def smoothness_loss(inputs):
    """inputs: (N, C, D, H, W) array. Returns scalar float32 loss."""
    N, C, D, H, W = inputs.shape
    NC = N * C
    HW = H * W
    L = D * HW
    Lp = ((L + 127) // 128) * 128            # lane extent used inside the kernel

    x = inputs.reshape(NC, L)                # contiguous -> free reshape
    if Lp != L:
        # TODO(synk): lane-unaligned volumes still pay one pad pass over HBM;
        # a 3-D (NC, D, H*W) block layout would remove it.
        x = jnp.pad(x, ((0, 0), (0, Lp - L)))

    itemsize = jnp.dtype(inputs.dtype).itemsize
    row_in = Lp * itemsize                   # bytes of one slab row (input dtype)
    row_f32 = Lp * 4

    # ---- generation-aware block-size / VMEM budgeting -----------------------
    vmem_cap = _vmem_capacity_bytes()        # 64 MiB (v7x) / 128 MiB (v5e, v6e)
    budget = (vmem_cap * 3) // 4
    target_in = (8 << 20) if vmem_cap > (96 << 20) else (4 << 20)
    fixed = 2 * 3 * row_f32 + (2 << 20)      # resident weight rows + slack
    per_row = 2 * row_in + 6 * row_f32       # dbl-buffered input + f32 temporaries
    b_vmem = max(1, (budget - fixed) // per_row)
    b_dma = max(1, target_in // row_in)

    if NC <= 8:
        # Cannot split legally (row block must be a multiple of 8 or == NC).
        B = NC
    else:
        b = min(b_dma, b_vmem, NC, -(-NC // 2))   # >= 2 blocks -> v7x megacore
        if (-(-NC // 8)) * row_in >= (1 << 20):   # >= 8 steps if blocks stay >= 1 MiB
            b = min(b, -(-NC // 8))
        B = max(8, (b // 8) * 8)
    num_blocks = -(-NC // B)
    mask_rows = (num_blocks * B) != NC            # no padding of the row axis

    need = fixed + B * per_row
    if need <= budget:
        vmem_limit = int(min(budget, max(need + (8 << 20), 32 << 20)))
    else:
        # Giant single slab: request what is actually needed and fail fast
        # rather than silently clamping below the requirement.
        # TODO(synk): add a second grid axis over D with a one-plane halo.
        vmem_limit = int(need)

    # ---- per-lane direction weights (mask / pair-count), built once ---------
    cnt_d = NC * (D - 1) * HW
    cnt_h = NC * D * (H - 1) * W
    cnt_w = NC * D * H * (W - 1)
    # 0 pairs -> inf weight -> NaN loss, matching torch.mean of an empty slice.
    inv = lambda c: (1.0 / c) if c > 0 else float("inf")
    lane = jnp.arange(Lp, dtype=jnp.int32)
    in_b = lane < L
    wd = (((lane >= HW) & in_b).astype(jnp.float32) * inv(cnt_d)).reshape(1, Lp)
    wh = ((((lane % HW) >= W) & in_b).astype(jnp.float32) * inv(cnt_h)).reshape(1, Lp)
    ww = ((((lane % W) >= 1) & in_b).astype(jnp.float32) * inv(cnt_w)).reshape(1, Lp)

    kernel = functools.partial(
        _smoothness_kernel,
        shift_d=HW % Lp, shift_h=W % Lp,
        block_rows=B, total_rows=NC, mask_rows=mask_rows,
        lane_groups=Lp // 128)

    block_sums = pl.pallas_call(
        kernel,
        out_shape=jax.ShapeDtypeStruct((num_blocks, 1), jnp.float32),
        grid=(num_blocks,),
        in_specs=[
            pl.BlockSpec((B, Lp), lambda i: (i, 0)),     # slab rows
            pl.BlockSpec((1, Lp), lambda i: (0, 0)),     # resident D weights
            pl.BlockSpec((1, Lp), lambda i: (0, 0)),     # resident H weights
            pl.BlockSpec((1, Lp), lambda i: (0, 0)),     # resident W weights
        ],
        out_specs=pl.BlockSpec((1, 1), lambda i: (i, 0),
                               memory_space=pltpu.SMEM),
        compiler_params=pltpu.CompilerParams(
            dimension_semantics=("parallel",),
            vmem_limit_bytes=vmem_limit),
    )(x, wd, wh, ww)

    return jnp.sum(block_sums)


def smoothness_loss_ref(inputs):
    x = inputs.astype(jnp.float32)
    d_var = jnp.mean(jnp.abs(x[:, :, :-1, :, :] - x[:, :, 1:, :, :]))
    h_var = jnp.mean(jnp.abs(x[:, :, :, :-1, :] - x[:, :, :, 1:, :]))
    w_var = jnp.mean(jnp.abs(x[:, :, :, :, :-1] - x[:, :, :, :, 1:]))
    return d_var + h_var + w_var


if __name__ == "__main__":
    loss_fn = jax.jit(smoothness_loss)

    # Primary case: (N, C, D, H, W) with lane-aligned L = 512, NC = 6 (one block).
    x1 = jax.random.normal(jax.random.PRNGKey(0), (2, 3, 4, 8, 16),
                           dtype=jnp.float32)
    out1 = jax.block_until_ready(loss_fn(x1))
    ref1 = smoothness_loss_ref(x1)
    assert jnp.allclose(out1, ref1, rtol=1e-5, atol=1e-6), (out1, ref1)

    # NC = 10 > 8 -> two 8-row blocks, last block row-masked (no N*C padding).
    x2 = jax.random.normal(jax.random.PRNGKey(1), (2, 5, 3, 8, 16),
                           dtype=jnp.float32)
    out2 = jax.block_until_ready(loss_fn(x2))
    ref2 = smoothness_loss_ref(x2)
    assert jnp.allclose(out2, ref2, rtol=1e-5, atol=1e-6), (out2, ref2)

    # Lane-unaligned volume (L = 105 -> 128) exercises the fallback lane pad.
    x3 = jax.random.normal(jax.random.PRNGKey(2), (1, 3, 3, 5, 7),
                           dtype=jnp.float32)
    out3 = jax.block_until_ready(loss_fn(x3))
    ref3 = smoothness_loss_ref(x3)
    assert jnp.allclose(out3, ref3, rtol=1e-5, atol=1e-6), (out3, ref3)

    print("KERNEL_OK")
</pallas_src>

<mosaic_0001>
module attributes {stable_mosaic.version = 11 : i64} {
  func.func @_smoothness_kernel(%arg0: i32, %arg1: memref<6x512xf32, #tpu.memory_space<vmem>>, %arg2: memref<1x512xf32, #tpu.memory_space<vmem>>, %arg3: memref<1x512xf32, #tpu.memory_space<vmem>>, %arg4: memref<1x512xf32, #tpu.memory_space<vmem>>, %arg5: memref<1x1xf32, #tpu.memory_space<smem>>) attributes {dimension_semantics = [#tpu.dimension_semantics<parallel>], iteration_bounds = array<i64: 1>, scalar_prefetch = 0 : i64, scratch_operands = 0 : i64, tpu.core_type = #tpu.core_type<tc>, window_params = [{transform_indices = @transform_0, window_bounds = array<i64: 6, 512>}, {pipeline_mode = #tpu.pipeline_mode<synchronous>, transform_indices = @transform_1, window_bounds = array<i64: 1, 512>}, {pipeline_mode = #tpu.pipeline_mode<synchronous>, transform_indices = @transform_2, window_bounds = array<i64: 1, 512>}, {pipeline_mode = #tpu.pipeline_mode<synchronous>, transform_indices = @transform_3, window_bounds = array<i64: 1, 512>}, {transform_indices = @transform_4, window_bounds = array<i64: 1, 1>}]} {
    %c0 = arith.constant 0 : index
    %c0_0 = arith.constant 0 : index
    %0 = vector.load %arg1[%c0, %c0_0] : memref<6x512xf32, #tpu.memory_space<vmem>>, vector<6x512xf32>
    %c128_i32 = arith.constant 128 : i32
    %1 = tpu.dynamic_rotate %0 by %c128_i32 dim 1 : vector<6x512xf32>, i32 -> vector<6x512xf32>
    %c0_1 = arith.constant 0 : index
    %c0_2 = arith.constant 0 : index
    %2 = vector.load %arg2[%c0_1, %c0_2] : memref<1x512xf32, #tpu.memory_space<vmem>>, vector<1x512xf32>
    %3 = arith.subf %0, %1 : vector<6x512xf32>
    %4 = math.absf %3 : vector<6x512xf32>
    %5 = vector.broadcast %2 : vector<1x512xf32> to vector<6x512xf32>
    %6 = arith.mulf %5, %4 : vector<6x512xf32>
    %c16_i32 = arith.constant 16 : i32
    %7 = tpu.dynamic_rotate %0 by %c16_i32 dim 1 : vector<6x512xf32>, i32 -> vector<6x512xf32>
    %c0_3 = arith.constant 0 : index
    %c0_4 = arith.constant 0 : index
    %8 = vector.load %arg3[%c0_3, %c0_4] : memref<1x512xf32, #tpu.memory_space<vmem>>, vector<1x512xf32>
    %9 = arith.subf %0, %7 : vector<6x512xf32>
    %10 = math.absf %9 : vector<6x512xf32>
    %11 = vector.broadcast %8 : vector<1x512xf32> to vector<6x512xf32>
    %12 = arith.mulf %11, %10 : vector<6x512xf32>
    %13 = arith.addf %6, %12 : vector<6x512xf32>
    %c1_i32 = arith.constant 1 : i32
    %14 = tpu.dynamic_rotate %0 by %c1_i32 dim 1 : vector<6x512xf32>, i32 -> vector<6x512xf32>
    %c0_5 = arith.constant 0 : index
    %c0_6 = arith.constant 0 : index
    %15 = vector.load %arg4[%c0_5, %c0_6] : memref<1x512xf32, #tpu.memory_space<vmem>>, vector<1x512xf32>
    %16 = arith.subf %0, %14 : vector<6x512xf32>
    %17 = math.absf %16 : vector<6x512xf32>
    %18 = vector.broadcast %15 : vector<1x512xf32> to vector<6x512xf32>
    %19 = arith.mulf %18, %17 : vector<6x512xf32>
    %20 = arith.addf %13, %19 : vector<6x512xf32>
    %21 = vector.extract_strided_slice %20 {offsets = [0, 0], sizes = [6, 128], strides = [1, 1]} : vector<6x512xf32> to vector<6x128xf32>
    %22 = vector.extract_strided_slice %20 {offsets = [0, 128], sizes = [6, 128], strides = [1, 1]} : vector<6x512xf32> to vector<6x128xf32>
    %23 = arith.addf %21, %22 : vector<6x128xf32>
    %24 = vector.extract_strided_slice %20 {offsets = [0, 256], sizes = [6, 128], strides = [1, 1]} : vector<6x512xf32> to vector<6x128xf32>
    %25 = arith.addf %23, %24 : vector<6x128xf32>
    %26 = vector.extract_strided_slice %20 {offsets = [0, 384], sizes = [6, 128], strides = [1, 1]} : vector<6x512xf32> to vector<6x128xf32>
    %27 = arith.addf %25, %26 : vector<6x128xf32>
    %28 = vector.shape_cast %27 : vector<6x128xf32> to vector<1x6x128xf32>
    %cst = arith.constant dense<0.000000e+00> : vector<1xf32>
    %29 = vector.multi_reduction <add>, %28, %cst [1, 2] : vector<1x6x128xf32> to vector<1xf32>
    %30 = vector.shape_cast %29 : vector<1xf32> to vector<1x1x1xf32>
    %31 = vector.extract %30[0, 0, 0] : f32 from vector<1x1x1xf32>
    %c0_7 = arith.constant 0 : index
    %c0_8 = arith.constant 0 : index
    %32 = memref.load %arg5[%c0_7, %c0_8] : memref<1x1xf32, #tpu.memory_space<smem>>
    memref.store %31, %arg5[%c0_7, %c0_8] : memref<1x1xf32, #tpu.memory_space<smem>>
    return
  }
  func.func @transform_0(%arg0: i32) -> (i32, i32) {
    %c0_i32 = arith.constant 0 : i32
    %c0_i32_0 = arith.constant 0 : i32
    return %arg0, %c0_i32 : i32, i32
  }
  func.func @transform_1(%arg0: i32) -> (i32, i32) {
    %c0_i32 = arith.constant 0 : i32
    %c0_i32_0 = arith.constant 0 : i32
    %c0_i32_1 = arith.constant 0 : i32
    return %c0_i32, %c0_i32_0 : i32, i32
  }
  func.func @transform_2(%arg0: i32) -> (i32, i32) {
    %c0_i32 = arith.constant 0 : i32
    %c0_i32_0 = arith.constant 0 : i32
    %c0_i32_1 = arith.constant 0 : i32
    return %c0_i32, %c0_i32_0 : i32, i32
  }
  func.func @transform_3(%arg0: i32) -> (i32, i32) {
    %c0_i32 = arith.constant 0 : i32
    %c0_i32_0 = arith.constant 0 : i32
    %c0_i32_1 = arith.constant 0 : i32
    return %c0_i32, %c0_i32_0 : i32, i32
  }
  func.func @transform_4(%arg0: i32) -> (i32, i32) {
    %c0_i32 = arith.constant 0 : i32
    %c0_i32_0 = arith.constant 0 : i32
    return %arg0, %c0_i32 : i32, i32
  }
}

</mosaic_0001>

<llo_original>
// kernel: smoothness_loss.1
$region0: #{smoothness_loss.1}
  #allocation0 [shape = 'u32[]', space=smem, size = 0x4, offset = 0x4, fixed_abs, tag = 'smem constant byte address 0x4 - core index']
  #allocation1 [shape = 'u32[144,128]{1,0:T(1,128)}', space=vmem, size = 0x12000, scoped, tag = 'internal scratch']
  %s0 = inlined_call_operand.vmem [shape: f32[6,512], index: 0, kind: input, shape index: {}]
  %s1 = inlined_call_operand.vmem [shape: f32[1,512], index: 1, kind: input, shape index: {}]
  %s2 = inlined_call_operand.vmem [shape: f32[1,512], index: 2, kind: input, shape index: {}]
  %s3 = inlined_call_operand.vmem [shape: f32[1,512], index: 3, kind: input, shape index: {}]
  %s4 = inlined_call_operand.hbm [shape: f32[1,1], index: 4, kind: output, shape index: {}]
  %s5 = sld [smem:[#allocation0]]
  $region26: #{smoothness_loss.1} parent=0
    _
  %s7 = ssub.s32 1, %s5
  %s8 = scalar_select 0, %s7, %s5
  $region1: #{smoothness_loss.1} parent=0
    #allocation2 [shape = 'u8[512]{0}', space=smem, size = 0x200, scoped, tag = 'output window, operand 0, single buffered']
    #allocation3 [shape = 's32[1]{0}', space=sflag, size = 0x4, scoped, tag = 'scoped memory for smoothness_loss.1']
    %9 = vsyncpa [#allocation3], 0
    // Predicated region
    $region2: #{smoothness_loss.1} parent=1 // pred_check
      _
    $region3: #{smoothness_loss.1} parent=1 // pred_check_branch
      %11 = sbr.rel (0) target = $region5
    $region4: #{smoothness_loss.1} parent=1 // pred_region
      _
    $region5: #{smoothness_loss.1} parent=1 // pred_fallthru
      _
    // Predicated region
    $region6: #{smoothness_loss.1} parent=1 // pred_check
      _
    $region7: #{smoothness_loss.1} parent=1 // pred_check_branch
      %13 = sbr.rel (0) target = $region9
    $region8: #{smoothness_loss.1} parent=1 // pred_region
      _
    $region9: #{smoothness_loss.1} parent=1 // pred_fallthru
      _
    // Predicated region
    $region10: #{smoothness_loss.1} parent=1 // pred_check
      _
    $region11: #{smoothness_loss.1} parent=1 // pred_check_branch
      %15 = sbr.rel (0) target = $region13
    $region12: #{smoothness_loss.1} parent=1 // pred_region
      _
    $region13: #{smoothness_loss.1} parent=1 // pred_fallthru
      _
    // Predicated region
    $region14: #{smoothness_loss.1} parent=1 // pred_check
      _
    $region15: #{smoothness_loss.1} parent=1 // pred_check_branch
      %17 = sbr.rel (0) target = $region17
    $region16: #{smoothness_loss.1} parent=1 // pred_region
      _
    $region17: #{smoothness_loss.1} parent=1 // pred_fallthru
      _
    %v18 = vld [vmem:[%s0] sm:$0x3f]
    %v19 = vld [vmem:[%s0 + $0x8] sm:$0x3f]
    %v20 = vld [vmem:[%s0 + $0x10] sm:$0x3f]
    %v21 = vld [vmem:[%s0 + $0x18] sm:$0x3f]
    %v22 = vld [vmem:[%s1] sm:$0xf]
    %v23 = vsub.f32 %v18, %v21
    %v24 = vsub.f32 %v19, %v18
    %v25 = vsub.f32 %v20, %v19
    %v26 = vsub.f32 %v21, %v20
    %v27 = vand.u32 2147483647, %v23
    %v28 = vand.u32 2147483647, %v24
    %v29 = vand.u32 2147483647, %v25
    %v30 = vand.u32 2147483647, %v26
    %v32 = vlaneseq
    %v33 = vshrl.u32 %v32, 7
    %v34 = vsub.s32 0, %v33
    %v35 = vrot.slane %v22, %v34
    %v36 = vlaneseq
    %v37 = vshrl.u32 %v36, 7
    %v38 = vsub.s32 1, %v37
    %v39 = vrot.slane %v22, %v38
    %v40 = vlaneseq
    %v41 = vshrl.u32 %v40, 7
    %v42 = vsub.s32 2, %v41
    %v43 = vrot.slane %v22, %v42
    %v44 = vlaneseq
    %v45 = vshrl.u32 %v44, 7
    %v46 = vsub.s32 3, %v45
    %v47 = vrot.slane %v22, %v46
    %v52 = vmul.f32 %v35, %v27
    %v53 = vmul.f32 %v39, %v28
    %v54 = vmul.f32 %v43, %v29
    %v55 = vmul.f32 %v47, %v30
    %56 = vrot.lane.b32.xlu0 %v18, 16
    %v57 = vpop.permute.xlu0 %56
    %58 = vrot.lane.b32.xlu0 %v19, 16
    %v59 = vpop.permute.xlu0 %58
    %60 = vrot.lane.b32.xlu0 %v20, 16
    %v61 = vpop.permute.xlu0 %60
    %62 = vrot.lane.b32.xlu0 %v21, 16
    %v63 = vpop.permute.xlu0 %62
    %v64 = vlaneseq
    %v65 = vand.u32 %v64, 127
    %vm66 = vcmp.lt.s32.totalorder %v65, 16
    %v67 = vsel %vm66, %v61, %v63
    %v68 = vsel %vm66, %v59, %v61
    %v69 = vsel %vm66, %v57, %v59
    %v70 = vsel %vm66, %v63, %v57
    %v71 = vld [vmem:[%s2] sm:$0xf]
    %v72 = vsub.f32 %v18, %v70
    %v73 = vsub.f32 %v19, %v69
    %v74 = vsub.f32 %v20, %v68
    %v75 = vsub.f32 %v21, %v67
    %v76 = vand.u32 2147483647, %v72
    %v77 = vand.u32 2147483647, %v73
    %v78 = vand.u32 2147483647, %v74
    %v79 = vand.u32 2147483647, %v75
    %v81 = vlaneseq
    %v82 = vshrl.u32 %v81, 7
    %v83 = vsub.s32 0, %v82
    %v84 = vrot.slane %v71, %v83
    %v85 = vlaneseq
    %v86 = vshrl.u32 %v85, 7
    %v87 = vsub.s32 1, %v86
    %v88 = vrot.slane %v71, %v87
    %v89 = vlaneseq
    %v90 = vshrl.u32 %v89, 7
    %v91 = vsub.s32 2, %v90
    %v92 = vrot.slane %v71, %v91
    %v93 = vlaneseq
    %v94 = vshrl.u32 %v93, 7
    %v95 = vsub.s32 3, %v94
    %v96 = vrot.slane %v71, %v95
    %v101 = vmul.f32 %v84, %v76
    %v102 = vmul.f32 %v88, %v77
    %v103 = vmul.f32 %v92, %v78
    %v104 = vmul.f32 %v96, %v79
    %v105 = vadd.f32 %v52, %v101
    %v106 = vadd.f32 %v53, %v102
    %v107 = vadd.f32 %v54, %v103
    %v108 = vadd.f32 %v55, %v104
    %109 = vrot.lane.b32.xlu0 %v18, 1
    %v110 = vpop.permute.xlu0 %109
    %111 = vrot.lane.b32.xlu0 %v19, 1
    %v112 = vpop.permute.xlu0 %111
    %113 = vrot.lane.b32.xlu0 %v20, 1
    %v114 = vpop.permute.xlu0 %113
    %115 = vrot.lane.b32.xlu0 %v21, 1
    %v116 = vpop.permute.xlu0 %115
    %vm117 = vcmp.lt.s32.totalorder %v65, 1
    %v118 = vsel %vm117, %v114, %v116
    %v119 = vsel %vm117, %v112, %v114
    %v120 = vsel %vm117, %v110, %v112
    %v121 = vsel %vm117, %v116, %v110
    %v122 = vld [vmem:[%s3] sm:$0xf]
    %v123 = vsub.f32 %v18, %v121
    %v124 = vsub.f32 %v19, %v120
    %v125 = vsub.f32 %v20, %v119
    %v126 = vsub.f32 %v21, %v118
    %v127 = vand.u32 2147483647, %v123
    %v128 = vand.u32 2147483647, %v124
    %v129 = vand.u32 2147483647, %v125
    %v130 = vand.u32 2147483647, %v126
    %v132 = vlaneseq
    %v133 = vshrl.u32 %v132, 7
    %v134 = vsub.s32 0, %v133
    %v135 = vrot.slane %v122, %v134
    %v136 = vlaneseq
    %v137 = vshrl.u32 %v136, 7
    %v138 = vsub.s32 1, %v137
    %v139 = vrot.slane %v122, %v138
    %v140 = vlaneseq
    %v141 = vshrl.u32 %v140, 7
    %v142 = vsub.s32 2, %v141
    %v143 = vrot.slane %v122, %v142
    %v144 = vlaneseq
    %v145 = vshrl.u32 %v144, 7
    %v146 = vsub.s32 3, %v145
    %v147 = vrot.slane %v122, %v146
    %v152 = vmul.f32 %v135, %v127
    %v153 = vmul.f32 %v139, %v128
    %v154 = vmul.f32 %v143, %v129
    %v155 = vmul.f32 %v147, %v130
    %v156 = vadd.f32 %v105, %v152
    %v157 = vadd.f32 %v106, %v153
    %v158 = vadd.f32 %v107, %v154
    %v159 = vadd.f32 %v108, %v155
    %v160 = vadd.f32 %v156, %v157
    %v161 = vadd.f32 %v160, %v158
    %v162 = vadd.f32 %v161, %v159
    %vm163 = vcmask 1045504
    %v164 = vsel %vm163, %v162, 0.0
    %165 = vadd.xlane.f32.xlu0 %v164
    %v166 = vpop.xlane.xlu0 %165
    %v167 = vrot.slane %v166, 4
    %v168 = vadd.f32 %v166, %v167
    %v169 = vrot.slane %v168, 2
    %v170 = vadd.f32 %v168, %v169
    %v171 = vrot.slane %v170, 1
    %v172 = vadd.f32 %v170, %v171
    %s173 = vtos %v172
    %s174 = scalar_lea.smem [#allocation2], 0
    %175 = sst [smem:[%s174]] %s173
    // Predicated region
    $region18: #{smoothness_loss.1} parent=1 // pred_check
      _
    $region19: #{smoothness_loss.1} parent=1 // pred_check_branch
      %177 = sbr.rel (0) target = $region21
    $region20: #{smoothness_loss.1} parent=1 // pred_region
      %s179 = ssub.s32 16, 16
      %180 = vsyncadd [#allocation3], %s179
      %183 = dma.smem_to_hbm [#allocation2], 16, %s4, [#allocation3]
    $region21: #{smoothness_loss.1} parent=1 // pred_fallthru
      _
    // Predicated region
    $region22: #{smoothness_loss.1} parent=1 // pred_check
      _
    $region23: #{smoothness_loss.1} parent=1 // pred_check_branch
      %185 = sbr.rel (0) target = $region25
    $region24: #{smoothness_loss.1} parent=1 // pred_region
      %186 = dma.done [#allocation3], 16
    $region25: #{smoothness_loss.1} parent=1 // pred_fallthru
      _
    %187 = sfence
    %188 = vsyncpa [#allocation3], 1

</llo_original>
